<compile_context>
chip_gen: v6e
topology: v6e:2x2x1
jax: 0.10.0
libtpu: 0.0.40
codegen_flags: <defaults>
</compile_context>

<pallas_src>
import functools

import jax
import jax.numpy as jnp
from jax.experimental import pallas as pl
from jax.experimental.pallas import tpu as pltpu


def _softplus(x):
    # Numerically robust single-pass softplus; matches
    # torch.nn.Softplus(beta=1, threshold=20) to float32 precision.
    return jnp.maximum(x, 0.0) + jnp.log1p(jnp.exp(-jnp.abs(x)))


def _fused_augodenet_kernel(t_ref, x_ref, *refs, n_main, n_aug,
                            effective_shape, compute_dtype):
    """Fused AugODEnet forward for one batch tile.

    refs layout:
      [wx, wt, b] * n_main  +  [wx, wt, b] * n_aug  +  [o_ref]
    """
    o_ref = refs[-1]
    w_refs = refs[:-1]
    main_refs = w_refs[: 3 * n_main]
    aug_refs = w_refs[3 * n_main:]

    t = t_ref[0, 0]          # scalar time from SMEM
    x = x_ref[...]           # (tile_m, D) activation tile in VMEM

    def chain(h, layer_refs, n_layers):
        for i in range(n_layers):
            wx = layer_refs[3 * i][...]        # (din, dout)
            wt = layer_refs[3 * i + 1][...]    # (1, dout)
            b = layer_refs[3 * i + 2][...]     # (1, dout)
            bias_t = t * wt + b                # hoisted time/bias term
            h = jnp.dot(h.astype(compute_dtype), wx.astype(compute_dtype),
                        preferred_element_type=jnp.float32) + bias_t
            if i < n_layers - 1:
                h = _softplus(h)
        return h

    dx = chain(x, main_refs, n_main)                       # (tile_m, eff)
    if n_aug > 0:
        aug = chain(x[:, effective_shape:], aug_refs, n_aug)  # (tile_m, D-eff)
        out = jnp.concatenate([dx, aug], axis=1)           # single full store
    else:
        out = dx
    o_ref[...] = out.astype(o_ref.dtype)


def _pick_batch_tile(batch, max_tile=512):
    """Largest multiple-of-8 divisor of `batch` <= max_tile, else full batch.

    NOTE(v7x): if weights/activations are scaled up, re-derive max_tile
    against the 64 MiB physical VMEM (weights + 2x double-buffered tiles)
    and set pltpu.CompilerParams(vmem_limit_bytes=...) accordingly.
    """
    if batch <= max_tile:
        return batch
    for tm in range(max_tile, 0, -8):
        if batch % tm == 0:
            return tm
    return batch


def init_concat_linear(key, din, dout):
    """Deterministic init mimicking torch.nn.Linear(din+1, dout) defaults."""
    fan_in = din + 1
    bound = 1.0 / float(fan_in) ** 0.5
    kw, kb = jax.random.split(key)
    W = jax.random.uniform(kw, (dout, din + 1), jnp.float32, -bound, bound)
    b = jax.random.uniform(kb, (dout,), jnp.float32, -bound, bound)
    wt = W[:, :1].T                 # (1, dout)  -- column multiplying t
    wx = W[:, 1:].T                 # (din, dout)
    return wx, wt, b.reshape(1, dout)


class AugODEnetPallas:
    """JAX/Pallas port of AugODEnet forward (1-D data, 'concat' layers)."""

    def __init__(self, hidden_dims, input_shape, effective_shape,
                 aug_hidden_dims=None, key=jax.random.PRNGKey(0),
                 compute_dtype=jnp.float32):
        self.effective_shape = int(effective_shape)
        self.compute_dtype = compute_dtype
        D = int(input_shape[0])
        self.input_dim = D
        aug_size = D - self.effective_shape
        if aug_hidden_dims is None:
            aug_hidden_dims = list(hidden_dims)

        main_dims = [D] + list(hidden_dims) + [self.effective_shape]
        n_main = len(main_dims) - 1
        if aug_size > 0:
            aug_dims = [aug_size] + list(aug_hidden_dims) + [aug_size]
            n_aug = len(aug_dims) - 1
        else:
            # Guard: zero-width augmented block -> no aug network needed.
            aug_dims, n_aug = [], 0

        keys = jax.random.split(key, max(n_main + n_aug, 2))
        self.main_params = [
            init_concat_linear(keys[i], main_dims[i], main_dims[i + 1])
            for i in range(n_main)
        ]
        self.aug_params = [
            init_concat_linear(keys[n_main + i], aug_dims[i], aug_dims[i + 1])
            for i in range(n_aug)
        ]

    def __call__(self, t, y):
        # y: (B, D);  t: python/JAX scalar
        B, D = y.shape
        t_arr = jnp.reshape(jnp.asarray(t, jnp.float32), (1, 1))

        n_main = len(self.main_params)
        n_aug = len(self.aug_params)

        flat_w, w_specs = [], []
        for (wx, wt, b) in self.main_params + self.aug_params:
            for w in (wx, wt, b):
                flat_w.append(w)
                # Full-array block, resident in VMEM, same block every step.
                w_specs.append(pl.BlockSpec(w.shape, lambda i: (0, 0)))

        tile_m = _pick_batch_tile(B)
        grid = (B // tile_m,)

        kernel = functools.partial(
            _fused_augodenet_kernel,
            n_main=n_main, n_aug=n_aug,
            effective_shape=self.effective_shape,
            compute_dtype=self.compute_dtype)

        return pl.pallas_call(
            kernel,
            out_shape=jax.ShapeDtypeStruct((B, D), jnp.float32),
            grid=grid,
            in_specs=[
                pl.BlockSpec((1, 1), lambda i: (0, 0),
                             memory_space=pltpu.MemorySpace.SMEM),  # t
                pl.BlockSpec((tile_m, D), lambda i: (i, 0)),        # y tile
            ] + w_specs,
            out_specs=pl.BlockSpec((tile_m, D), lambda i: (i, 0)),
            compiler_params=pltpu.CompilerParams(
                dimension_semantics=("parallel",)),
        )(t_arr, y, *flat_w)

    # pure-JAX reference (no Pallas) for correctness check
    def reference(self, t, y):
        t = jnp.asarray(t, jnp.float32)
        dx = y
        for i, (wx, wt, b) in enumerate(self.main_params):
            dx = dx @ wx + t * wt + b
            if i < len(self.main_params) - 1:
                dx = _softplus(dx)
        if len(self.aug_params) == 0:
            return dx
        aug = y[:, self.effective_shape:]
        for i, (wx, wt, b) in enumerate(self.aug_params):
            aug = aug @ wx + t * wt + b
            if i < len(self.aug_params) - 1:
                aug = _softplus(aug)
        return jnp.concatenate([dx, aug], axis=1)


if __name__ == "__main__":
    # Small 1-D setup: total dim 16 = effective(8) + augmented(8)
    B = 2
    effective_shape = 8
    input_shape = (16,)           # (channels,) for 1-D data
    hidden_dims = (32, 32)

    key = jax.random.PRNGKey(0)
    k_model, k_data = jax.random.split(key)

    model = AugODEnetPallas(hidden_dims, input_shape, effective_shape,
                            key=k_model)

    y = jax.random.normal(k_data, (B, input_shape[0]), jnp.float32)
    t = jnp.float32(0.5)

    out = model(t, y)
    out = jax.block_until_ready(out)

    ref = model.reference(t, y)
    assert out.shape == (B, input_shape[0]), out.shape
    assert jnp.allclose(out, ref, atol=1e-5, rtol=1e-5), "mismatch vs reference"

    print("KERNEL_OK")
</pallas_src>

<mosaic_0001>
module attributes {stable_mosaic.version = 11 : i64} {
  func.func @_fused_augodenet_kernel(%arg0: i32, %arg1: memref<1x1xf32, #tpu.memory_space<smem>>, %arg2: memref<2x16xf32, #tpu.memory_space<vmem>>, %arg3: memref<16x32xf32, #tpu.memory_space<vmem>>, %arg4: memref<1x32xf32, #tpu.memory_space<vmem>>, %arg5: memref<1x32xf32, #tpu.memory_space<vmem>>, %arg6: memref<32x32xf32, #tpu.memory_space<vmem>>, %arg7: memref<1x32xf32, #tpu.memory_space<vmem>>, %arg8: memref<1x32xf32, #tpu.memory_space<vmem>>, %arg9: memref<32x8xf32, #tpu.memory_space<vmem>>, %arg10: memref<1x8xf32, #tpu.memory_space<vmem>>, %arg11: memref<1x8xf32, #tpu.memory_space<vmem>>, %arg12: memref<8x32xf32, #tpu.memory_space<vmem>>, %arg13: memref<1x32xf32, #tpu.memory_space<vmem>>, %arg14: memref<1x32xf32, #tpu.memory_space<vmem>>, %arg15: memref<32x32xf32, #tpu.memory_space<vmem>>, %arg16: memref<1x32xf32, #tpu.memory_space<vmem>>, %arg17: memref<1x32xf32, #tpu.memory_space<vmem>>, %arg18: memref<32x8xf32, #tpu.memory_space<vmem>>, %arg19: memref<1x8xf32, #tpu.memory_space<vmem>>, %arg20: memref<1x8xf32, #tpu.memory_space<vmem>>, %arg21: memref<2x16xf32, #tpu.memory_space<vmem>>) attributes {dimension_semantics = [#tpu.dimension_semantics<parallel>], iteration_bounds = array<i64: 1>, scalar_prefetch = 0 : i64, scratch_operands = 0 : i64, tpu.core_type = #tpu.core_type<tc>, window_params = [{transform_indices = @transform_0, window_bounds = array<i64: 1, 1>}, {transform_indices = @transform_1, window_bounds = array<i64: 2, 16>}, {pipeline_mode = #tpu.pipeline_mode<synchronous>, transform_indices = @transform_2, window_bounds = array<i64: 16, 32>}, {pipeline_mode = #tpu.pipeline_mode<synchronous>, transform_indices = @transform_3, window_bounds = array<i64: 1, 32>}, {pipeline_mode = #tpu.pipeline_mode<synchronous>, transform_indices = @transform_4, window_bounds = array<i64: 1, 32>}, {pipeline_mode = #tpu.pipeline_mode<synchronous>, transform_indices = @transform_5, window_bounds = array<i64: 32, 32>}, {pipeline_mode = #tpu.pipeline_mode<synchronous>, transform_indices = @transform_6, window_bounds = array<i64: 1, 32>}, {pipeline_mode = #tpu.pipeline_mode<synchronous>, transform_indices = @transform_7, window_bounds = array<i64: 1, 32>}, {pipeline_mode = #tpu.pipeline_mode<synchronous>, transform_indices = @transform_8, window_bounds = array<i64: 32, 8>}, {pipeline_mode = #tpu.pipeline_mode<synchronous>, transform_indices = @transform_9, window_bounds = array<i64: 1, 8>}, {pipeline_mode = #tpu.pipeline_mode<synchronous>, transform_indices = @transform_10, window_bounds = array<i64: 1, 8>}, {pipeline_mode = #tpu.pipeline_mode<synchronous>, transform_indices = @transform_11, window_bounds = array<i64: 8, 32>}, {pipeline_mode = #tpu.pipeline_mode<synchronous>, transform_indices = @transform_12, window_bounds = array<i64: 1, 32>}, {pipeline_mode = #tpu.pipeline_mode<synchronous>, transform_indices = @transform_13, window_bounds = array<i64: 1, 32>}, {pipeline_mode = #tpu.pipeline_mode<synchronous>, transform_indices = @transform_14, window_bounds = array<i64: 32, 32>}, {pipeline_mode = #tpu.pipeline_mode<synchronous>, transform_indices = @transform_15, window_bounds = array<i64: 1, 32>}, {pipeline_mode = #tpu.pipeline_mode<synchronous>, transform_indices = @transform_16, window_bounds = array<i64: 1, 32>}, {pipeline_mode = #tpu.pipeline_mode<synchronous>, transform_indices = @transform_17, window_bounds = array<i64: 32, 8>}, {pipeline_mode = #tpu.pipeline_mode<synchronous>, transform_indices = @transform_18, window_bounds = array<i64: 1, 8>}, {pipeline_mode = #tpu.pipeline_mode<synchronous>, transform_indices = @transform_19, window_bounds = array<i64: 1, 8>}, {transform_indices = @transform_20, window_bounds = array<i64: 2, 16>}]} {
    %c0 = arith.constant 0 : index
    %c0_0 = arith.constant 0 : index
    %0 = memref.load %arg1[%c0, %c0_0] : memref<1x1xf32, #tpu.memory_space<smem>>
    %c0_1 = arith.constant 0 : index
    %c0_2 = arith.constant 0 : index
    %1 = vector.load %arg2[%c0_1, %c0_2] : memref<2x16xf32, #tpu.memory_space<vmem>>, vector<2x16xf32>
    %c0_3 = arith.constant 0 : index
    %c0_4 = arith.constant 0 : index
    %2 = vector.load %arg3[%c0_3, %c0_4] : memref<16x32xf32, #tpu.memory_space<vmem>>, vector<16x32xf32>
    %c0_5 = arith.constant 0 : index
    %c0_6 = arith.constant 0 : index
    %3 = vector.load %arg4[%c0_5, %c0_6] : memref<1x32xf32, #tpu.memory_space<vmem>>, vector<1x32xf32>
    %c0_7 = arith.constant 0 : index
    %c0_8 = arith.constant 0 : index
    %4 = vector.load %arg5[%c0_7, %c0_8] : memref<1x32xf32, #tpu.memory_space<vmem>>, vector<1x32xf32>
    %5 = vector.broadcast %0 : f32 to vector<1x32xf32>
    %6 = arith.mulf %5, %3 : vector<1x32xf32>
    %7 = arith.addf %6, %4 : vector<1x32xf32>
    %cst = arith.constant dense<0.000000e+00> : vector<2x32xf32>
    %8 = tpu.matmul %1, %2, %cst {dimension_numbers = #tpu.dot_dimension_numbers<[1], [0], [0], [1], [0, 0, 1, 1], [], []>} : vector<2x16xf32>, vector<16x32xf32>, vector<2x32xf32> -> vector<2x32xf32>
    %9 = vector.broadcast %7 : vector<1x32xf32> to vector<2x32xf32>
    %10 = arith.addf %8, %9 : vector<2x32xf32>
    %cst_9 = arith.constant 0.000000e+00 : f32
    %11 = vector.broadcast %cst_9 : f32 to vector<2x32xf32>
    %12 = arith.maximumf %10, %11 : vector<2x32xf32>
    %13 = math.absf %10 : vector<2x32xf32>
    %cst_10 = arith.constant 0.000000e+00 : f32
    %14 = vector.broadcast %cst_10 : f32 to vector<2x32xf32>
    %15 = arith.subf %14, %13 : vector<2x32xf32>
    %16 = math.exp %15 : vector<2x32xf32>
    %17 = math.log1p %16 : vector<2x32xf32>
    %18 = arith.addf %12, %17 : vector<2x32xf32>
    %c0_11 = arith.constant 0 : index
    %c0_12 = arith.constant 0 : index
    %19 = vector.load %arg6[%c0_11, %c0_12] : memref<32x32xf32, #tpu.memory_space<vmem>>, vector<32x32xf32>
    %c0_13 = arith.constant 0 : index
    %c0_14 = arith.constant 0 : index
    %20 = vector.load %arg7[%c0_13, %c0_14] : memref<1x32xf32, #tpu.memory_space<vmem>>, vector<1x32xf32>
    %c0_15 = arith.constant 0 : index
    %c0_16 = arith.constant 0 : index
    %21 = vector.load %arg8[%c0_15, %c0_16] : memref<1x32xf32, #tpu.memory_space<vmem>>, vector<1x32xf32>
    %22 = vector.broadcast %0 : f32 to vector<1x32xf32>
    %23 = arith.mulf %22, %20 : vector<1x32xf32>
    %24 = arith.addf %23, %21 : vector<1x32xf32>
    %cst_17 = arith.constant dense<0.000000e+00> : vector<2x32xf32>
    %25 = tpu.matmul %18, %19, %cst_17 {dimension_numbers = #tpu.dot_dimension_numbers<[1], [0], [0], [1], [0, 0, 1, 1], [], []>} : vector<2x32xf32>, vector<32x32xf32>, vector<2x32xf32> -> vector<2x32xf32>
    %26 = vector.broadcast %24 : vector<1x32xf32> to vector<2x32xf32>
    %27 = arith.addf %25, %26 : vector<2x32xf32>
    %cst_18 = arith.constant 0.000000e+00 : f32
    %28 = vector.broadcast %cst_18 : f32 to vector<2x32xf32>
    %29 = arith.maximumf %27, %28 : vector<2x32xf32>
    %30 = math.absf %27 : vector<2x32xf32>
    %cst_19 = arith.constant 0.000000e+00 : f32
    %31 = vector.broadcast %cst_19 : f32 to vector<2x32xf32>
    %32 = arith.subf %31, %30 : vector<2x32xf32>
    %33 = math.exp %32 : vector<2x32xf32>
    %34 = math.log1p %33 : vector<2x32xf32>
    %35 = arith.addf %29, %34 : vector<2x32xf32>
    %c0_20 = arith.constant 0 : index
    %c0_21 = arith.constant 0 : index
    %36 = vector.load %arg9[%c0_20, %c0_21] : memref<32x8xf32, #tpu.memory_space<vmem>>, vector<32x8xf32>
    %c0_22 = arith.constant 0 : index
    %c0_23 = arith.constant 0 : index
    %37 = vector.load %arg10[%c0_22, %c0_23] : memref<1x8xf32, #tpu.memory_space<vmem>>, vector<1x8xf32>
    %c0_24 = arith.constant 0 : index
    %c0_25 = arith.constant 0 : index
    %38 = vector.load %arg11[%c0_24, %c0_25] : memref<1x8xf32, #tpu.memory_space<vmem>>, vector<1x8xf32>
    %39 = vector.broadcast %0 : f32 to vector<1x8xf32>
    %40 = arith.mulf %39, %37 : vector<1x8xf32>
    %41 = arith.addf %40, %38 : vector<1x8xf32>
    %cst_26 = arith.constant dense<0.000000e+00> : vector<2x8xf32>
    %42 = tpu.matmul %35, %36, %cst_26 {dimension_numbers = #tpu.dot_dimension_numbers<[1], [0], [0], [1], [0, 0, 1, 1], [], []>} : vector<2x32xf32>, vector<32x8xf32>, vector<2x8xf32> -> vector<2x8xf32>
    %43 = vector.broadcast %41 : vector<1x8xf32> to vector<2x8xf32>
    %44 = arith.addf %42, %43 : vector<2x8xf32>
    %45 = vector.extract_strided_slice %1 {offsets = [0, 8], sizes = [2, 8], strides = [1, 1]} : vector<2x16xf32> to vector<2x8xf32>
    %c0_27 = arith.constant 0 : index
    %c0_28 = arith.constant 0 : index
    %46 = vector.load %arg12[%c0_27, %c0_28] : memref<8x32xf32, #tpu.memory_space<vmem>>, vector<8x32xf32>
    %c0_29 = arith.constant 0 : index
    %c0_30 = arith.constant 0 : index
    %47 = vector.load %arg13[%c0_29, %c0_30] : memref<1x32xf32, #tpu.memory_space<vmem>>, vector<1x32xf32>
    %c0_31 = arith.constant 0 : index
    %c0_32 = arith.constant 0 : index
    %48 = vector.load %arg14[%c0_31, %c0_32] : memref<1x32xf32, #tpu.memory_space<vmem>>, vector<1x32xf32>
    %49 = vector.broadcast %0 : f32 to vector<1x32xf32>
    %50 = arith.mulf %49, %47 : vector<1x32xf32>
    %51 = arith.addf %50, %48 : vector<1x32xf32>
    %cst_33 = arith.constant dense<0.000000e+00> : vector<2x32xf32>
    %52 = tpu.matmul %45, %46, %cst_33 {dimension_numbers = #tpu.dot_dimension_numbers<[1], [0], [0], [1], [0, 0, 1, 1], [], []>} : vector<2x8xf32>, vector<8x32xf32>, vector<2x32xf32> -> vector<2x32xf32>
    %53 = vector.broadcast %51 : vector<1x32xf32> to vector<2x32xf32>
    %54 = arith.addf %52, %53 : vector<2x32xf32>
    %cst_34 = arith.constant 0.000000e+00 : f32
    %55 = vector.broadcast %cst_34 : f32 to vector<2x32xf32>
    %56 = arith.maximumf %54, %55 : vector<2x32xf32>
    %57 = math.absf %54 : vector<2x32xf32>
    %cst_35 = arith.constant 0.000000e+00 : f32
    %58 = vector.broadcast %cst_35 : f32 to vector<2x32xf32>
    %59 = arith.subf %58, %57 : vector<2x32xf32>
    %60 = math.exp %59 : vector<2x32xf32>
    %61 = math.log1p %60 : vector<2x32xf32>
    %62 = arith.addf %56, %61 : vector<2x32xf32>
    %c0_36 = arith.constant 0 : index
    %c0_37 = arith.constant 0 : index
    %63 = vector.load %arg15[%c0_36, %c0_37] : memref<32x32xf32, #tpu.memory_space<vmem>>, vector<32x32xf32>
    %c0_38 = arith.constant 0 : index
    %c0_39 = arith.constant 0 : index
    %64 = vector.load %arg16[%c0_38, %c0_39] : memref<1x32xf32, #tpu.memory_space<vmem>>, vector<1x32xf32>
    %c0_40 = arith.constant 0 : index
    %c0_41 = arith.constant 0 : index
    %65 = vector.load %arg17[%c0_40, %c0_41] : memref<1x32xf32, #tpu.memory_space<vmem>>, vector<1x32xf32>
    %66 = vector.broadcast %0 : f32 to vector<1x32xf32>
    %67 = arith.mulf %66, %64 : vector<1x32xf32>
    %68 = arith.addf %67, %65 : vector<1x32xf32>
    %cst_42 = arith.constant dense<0.000000e+00> : vector<2x32xf32>
    %69 = tpu.matmul %62, %63, %cst_42 {dimension_numbers = #tpu.dot_dimension_numbers<[1], [0], [0], [1], [0, 0, 1, 1], [], []>} : vector<2x32xf32>, vector<32x32xf32>, vector<2x32xf32> -> vector<2x32xf32>
    %70 = vector.broadcast %68 : vector<1x32xf32> to vector<2x32xf32>
    %71 = arith.addf %69, %70 : vector<2x32xf32>
    %cst_43 = arith.constant 0.000000e+00 : f32
    %72 = vector.broadcast %cst_43 : f32 to vector<2x32xf32>
    %73 = arith.maximumf %71, %72 : vector<2x32xf32>
    %74 = math.absf %71 : vector<2x32xf32>
    %cst_44 = arith.constant 0.000000e+00 : f32
    %75 = vector.broadcast %cst_44 : f32 to vector<2x32xf32>
    %76 = arith.subf %75, %74 : vector<2x32xf32>
    %77 = math.exp %76 : vector<2x32xf32>
    %78 = math.log1p %77 : vector<2x32xf32>
    %79 = arith.addf %73, %78 : vector<2x32xf32>
    %c0_45 = arith.constant 0 : index
    %c0_46 = arith.constant 0 : index
    %80 = vector.load %arg18[%c0_45, %c0_46] : memref<32x8xf32, #tpu.memory_space<vmem>>, vector<32x8xf32>
    %c0_47 = arith.constant 0 : index
    %c0_48 = arith.constant 0 : index
    %81 = vector.load %arg19[%c0_47, %c0_48] : memref<1x8xf32, #tpu.memory_space<vmem>>, vector<1x8xf32>
    %c0_49 = arith.constant 0 : index
    %c0_50 = arith.constant 0 : index
    %82 = vector.load %arg20[%c0_49, %c0_50] : memref<1x8xf32, #tpu.memory_space<vmem>>, vector<1x8xf32>
    %83 = vector.broadcast %0 : f32 to vector<1x8xf32>
    %84 = arith.mulf %83, %81 : vector<1x8xf32>
    %85 = arith.addf %84, %82 : vector<1x8xf32>
    %cst_51 = arith.constant dense<0.000000e+00> : vector<2x8xf32>
    %86 = tpu.matmul %79, %80, %cst_51 {dimension_numbers = #tpu.dot_dimension_numbers<[1], [0], [0], [1], [0, 0, 1, 1], [], []>} : vector<2x32xf32>, vector<32x8xf32>, vector<2x8xf32> -> vector<2x8xf32>
    %87 = vector.broadcast %85 : vector<1x8xf32> to vector<2x8xf32>
    %88 = arith.addf %86, %87 : vector<2x8xf32>
    %89 = tpu.concatenate %44, %88 in 1 : vector<2x8xf32>, vector<2x8xf32> -> vector<2x16xf32>
    %c0_52 = arith.constant 0 : index
    %c0_53 = arith.constant 0 : index
    %90 = vector.load %arg21[%c0_52, %c0_53] : memref<2x16xf32, #tpu.memory_space<vmem>>, vector<2x16xf32>
    tpu.vector_store %arg21[%c0_52, %c0_53], %89 {strides = array<i32>} : memref<2x16xf32, #tpu.memory_space<vmem>>, vector<2x16xf32>,
    return
  }
  func.func @transform_0(%arg0: i32) -> (i32, i32) {
    %c0_i32 = arith.constant 0 : i32
    %c0_i32_0 = arith.constant 0 : i32
    %c0_i32_1 = arith.constant 0 : i32
    return %c0_i32, %c0_i32_0 : i32, i32
  }
  func.func @transform_1(%arg0: i32) -> (i32, i32) {
    %c0_i32 = arith.constant 0 : i32
    %c0_i32_0 = arith.constant 0 : i32
    return %arg0, %c0_i32 : i32, i32
  }
  func.func @transform_2(%arg0: i32) -> (i32, i32) {
    %c0_i32 = arith.constant 0 : i32
    %c0_i32_0 = arith.constant 0 : i32
    %c0_i32_1 = arith.constant 0 : i32
    return %c0_i32, %c0_i32_0 : i32, i32
  }
  func.func @transform_3(%arg0: i32) -> (i32, i32) {
    %c0_i32 = arith.constant 0 : i32
    %c0_i32_0 = arith.constant 0 : i32
    %c0_i32_1 = arith.constant 0 : i32
    return %c0_i32, %c0_i32_0 : i32, i32
  }
  func.func @transform_4(%arg0: i32) -> (i32, i32) {
    %c0_i32 = arith.constant 0 : i32
    %c0_i32_0 = arith.constant 0 : i32
    %c0_i32_1 = arith.constant 0 : i32
    return %c0_i32, %c0_i32_0 : i32, i32
  }
  func.func @transform_5(%arg0: i32) -> (i32, i32) {
    %c0_i32 = arith.constant 0 : i32
    %c0_i32_0 = arith.constant 0 : i32
    %c0_i32_1 = arith.constant 0 : i32
    return %c0_i32, %c0_i32_0 : i32, i32
  }
  func.func @transform_6(%arg0: i32) -> (i32, i32) {
    %c0_i32 = arith.constant 0 : i32
    %c0_i32_0 = arith.constant 0 : i32
    %c0_i32_1 = arith.constant 0 : i32
    return %c0_i32, %c0_i32_0 : i32, i32
  }
  func.func @transform_7(%arg0: i32) -> (i32, i32) {
    %c0_i32 = arith.constant 0 : i32
    %c0_i32_0 = arith.constant 0 : i32
    %c0_i32_1 = arith.constant 0 : i32
    return %c0_i32, %c0_i32_0 : i32, i32
  }
  func.func @transform_8(%arg0: i32) -> (i32, i32) {
    %c0_i32 = arith.constant 0 : i32
    %c0_i32_0 = arith.constant 0 : i32
    %c0_i32_1 = arith.constant 0 : i32
    return %c0_i32, %c0_i32_0 : i32, i32
  }
  func.func @transform_9(%arg0: i32) -> (i32, i32) {
    %c0_i32 = arith.constant 0 : i32
    %c0_i32_0 = arith.constant 0 : i32
    %c0_i32_1 = arith.constant 0 : i32
    return %c0_i32, %c0_i32_0 : i32, i32
  }
  func.func @transform_10(%arg0: i32) -> (i32, i32) {
    %c0_i32 = arith.constant 0 : i32
    %c0_i32_0 = arith.constant 0 : i32
    %c0_i32_1 = arith.constant 0 : i32
    return %c0_i32, %c0_i32_0 : i32, i32
  }
  func.func @transform_11(%arg0: i32) -> (i32, i32) {
    %c0_i32 = arith.constant 0 : i32
    %c0_i32_0 = arith.constant 0 : i32
    %c0_i32_1 = arith.constant 0 : i32
    return %c0_i32, %c0_i32_0 : i32, i32
  }
  func.func @transform_12(%arg0: i32) -> (i32, i32) {
    %c0_i32 = arith.constant 0 : i32
    %c0_i32_0 = arith.constant 0 : i32
    %c0_i32_1 = arith.constant 0 : i32
    return %c0_i32, %c0_i32_0 : i32, i32
  }
  func.func @transform_13(%arg0: i32) -> (i32, i32) {
    %c0_i32 = arith.constant 0 : i32
    %c0_i32_0 = arith.constant 0 : i32
    %c0_i32_1 = arith.constant 0 : i32
    return %c0_i32, %c0_i32_0 : i32, i32
  }
  func.func @transform_14(%arg0: i32) -> (i32, i32) {
    %c0_i32 = arith.constant 0 : i32
    %c0_i32_0 = arith.constant 0 : i32
    %c0_i32_1 = arith.constant 0 : i32
    return %c0_i32, %c0_i32_0 : i32, i32
  }
  func.func @transform_15(%arg0: i32) -> (i32, i32) {
    %c0_i32 = arith.constant 0 : i32
    %c0_i32_0 = arith.constant 0 : i32
    %c0_i32_1 = arith.constant 0 : i32
    return %c0_i32, %c0_i32_0 : i32, i32
  }
  func.func @transform_16(%arg0: i32) -> (i32, i32) {
    %c0_i32 = arith.constant 0 : i32
    %c0_i32_0 = arith.constant 0 : i32
    %c0_i32_1 = arith.constant 0 : i32
    return %c0_i32, %c0_i32_0 : i32, i32
  }
  func.func @transform_17(%arg0: i32) -> (i32, i32) {
    %c0_i32 = arith.constant 0 : i32
    %c0_i32_0 = arith.constant 0 : i32
    %c0_i32_1 = arith.constant 0 : i32
    return %c0_i32, %c0_i32_0 : i32, i32
  }
  func.func @transform_18(%arg0: i32) -> (i32, i32) {
    %c0_i32 = arith.constant 0 : i32
    %c0_i32_0 = arith.constant 0 : i32
    %c0_i32_1 = arith.constant 0 : i32
    return %c0_i32, %c0_i32_0 : i32, i32
  }
  func.func @transform_19(%arg0: i32) -> (i32, i32) {
    %c0_i32 = arith.constant 0 : i32
    %c0_i32_0 = arith.constant 0 : i32
    %c0_i32_1 = arith.constant 0 : i32
    return %c0_i32, %c0_i32_0 : i32, i32
  }
  func.func @transform_20(%arg0: i32) -> (i32, i32) {
    %c0_i32 = arith.constant 0 : i32
    %c0_i32_0 = arith.constant 0 : i32
    return %arg0, %c0_i32 : i32, i32
  }
}

</mosaic_0001>

<llo_original>
// kernel: tpu_custom_call.1
$region0: #{tpu_custom_call.1}
  #allocation0 [shape = 'u32[]', space=smem, size = 0x4, offset = 0x4, fixed_abs, tag = 'smem constant byte address 0x4 - core index']
  #allocation1 [shape = 'u32[144,128]{1,0:T(1,128)}', space=vmem, size = 0x12000, scoped, tag = 'internal scratch']
  #allocation2 [shape = 'f32[1,1]{1,0:T(1,128)S(6)}', space=smem, size = 0x200, scoped, tag = 'scoped memory for tpu_custom_call.1']
  %s0 = inlined_call_operand.<no memory space> [shape: f32[1,1], index: 0, kind: input, shape index: {}]
  %s1 = inlined_call_operand.hbm [shape: f32[2,16], index: 1, kind: input, shape index: {}]
  %s2 = inlined_call_operand.vmem [shape: f32[16,32], index: 2, kind: input, shape index: {}]
  %s3 = inlined_call_operand.hbm [shape: f32[1,32], index: 3, kind: input, shape index: {}]
  %s4 = inlined_call_operand.hbm [shape: f32[1,32], index: 4, kind: input, shape index: {}]
  %s5 = inlined_call_operand.vmem [shape: f32[32,32], index: 5, kind: input, shape index: {}]
  %s6 = inlined_call_operand.hbm [shape: f32[1,32], index: 6, kind: input, shape index: {}]
  %s7 = inlined_call_operand.hbm [shape: f32[1,32], index: 7, kind: input, shape index: {}]
  %s8 = inlined_call_operand.vmem [shape: f32[32,8], index: 8, kind: input, shape index: {}]
  %s9 = inlined_call_operand.hbm [shape: f32[1,8], index: 9, kind: input, shape index: {}]
  %s10 = inlined_call_operand.vmem [shape: f32[1,8], index: 10, kind: input, shape index: {}]
  %s11 = inlined_call_operand.hbm [shape: f32[8,32], index: 11, kind: input, shape index: {}]
  %s12 = inlined_call_operand.vmem [shape: f32[1,32], index: 12, kind: input, shape index: {}]
  %s13 = inlined_call_operand.vmem [shape: f32[1,32], index: 13, kind: input, shape index: {}]
  %s14 = inlined_call_operand.vmem [shape: f32[32,32], index: 14, kind: input, shape index: {}]
  %s15 = inlined_call_operand.vmem [shape: f32[1,32], index: 15, kind: input, shape index: {}]
  %s16 = inlined_call_operand.vmem [shape: f32[1,32], index: 16, kind: input, shape index: {}]
  %s17 = inlined_call_operand.vmem [shape: f32[32,8], index: 17, kind: input, shape index: {}]
  %s18 = inlined_call_operand.vmem [shape: f32[1,8], index: 18, kind: input, shape index: {}]
  %s19 = inlined_call_operand.vmem [shape: f32[1,8], index: 19, kind: input, shape index: {}]
  %s20 = inlined_call_operand.hbm [shape: f32[2,16], index: 20, kind: output, shape index: {}]
  %s21 = sld [smem:[#allocation0]]
  $region118: #{tpu_custom_call.1} parent=0
    _
  %s23 = ssub.s32 1, %s21
  %s24 = scalar_select 0, %s23, %s21
  %25 = sst [smem:[#allocation2]] %s0
  $region1: #{tpu_custom_call.1} parent=0
    #allocation3 [shape = 'u8[1024]{0}', space=vmem, size = 0x400, scoped, tag = 'input window, operand 1, single buffered']
    #allocation4 [shape = 's32[1]{0}', space=sflag, size = 0x4, scoped, tag = 'scoped memory for tpu_custom_call.1']
    #allocation5 [shape = 's32[1]{0}', space=sflag, size = 0x4, scoped, tag = 'scoped memory for tpu_custom_call.1']
    #allocation6 [shape = 'u8[512]{0}', space=vmem, size = 0x400, scoped, tag = 'input window, operand 3, single buffered']
    #allocation7 [shape = 's32[1]{0}', space=sflag, size = 0x4, scoped, tag = 'scoped memory for tpu_custom_call.1']
    #allocation8 [shape = 'u8[512]{0}', space=vmem, size = 0x400, scoped, tag = 'input window, operand 4, single buffered']
    #allocation9 [shape = 'u8[512]{0}', space=vmem, size = 0x400, scoped, tag = 'input window, operand 6, single buffered']
    #allocation10 [shape = 's32[1]{0}', space=sflag, size = 0x4, scoped, tag = 'scoped memory for tpu_custom_call.1']
    #allocation11 [shape = 'u8[512]{0}', space=vmem, size = 0x400, scoped, tag = 'input window, operand 7, single buffered']
    #allocation12 [shape = 'u8[512]{0}', space=vmem, size = 0x400, scoped, tag = 'input window, operand 9, single buffered']
    #allocation13 [shape = 's32[1]{0}', space=sflag, size = 0x4, scoped, tag = 'scoped memory for tpu_custom_call.1']
    #allocation14 [shape = 'u8[4096]{0}', space=vmem, size = 0x1000, scoped, tag = 'input window, operand 11, single buffered']
    #allocation15 [shape = 'u8[1024]{0}', space=vmem, size = 0x400, scoped, tag = 'output window, operand 0, single buffered']
    %26 = vsyncpa [#allocation4], 0
    %27 = vsyncpa [#allocation7], 0
    %28 = vsyncpa [#allocation10], 0
    %29 = vsyncpa [#allocation13], 0
    %30 = vsyncpa [#allocation5], 0
    // Predicated region
    $region2: #{tpu_custom_call.1} parent=1 // pred_check
      _
    $region3: #{tpu_custom_call.1} parent=1 // pred_check_branch
      %32 = sbr.rel (0) target = $region5
    $region4: #{tpu_custom_call.1} parent=1 // pred_region
      _
    $region5: #{tpu_custom_call.1} parent=1 // pred_fallthru
      _
    // Predicated region
    $region6: #{tpu_custom_call.1} parent=1 // pred_check
      _
    $region7: #{tpu_custom_call.1} parent=1 // pred_check_branch
      %34 = sbr.rel (0) target = $region9
    $region8: #{tpu_custom_call.1} parent=1 // pred_region
      %s36 = ssub.s32 32, 32
      %37 = vsyncadd [#allocation4], %s36
      %s39 = sshll.u32 [#allocation3], 4
      %s40 = int_to_ptr.vmem [resolvable:$true] %s39
      %42 = dma.hbm_to_vmem [thread:$0]  %s1, 32, %s40, [#allocation4]
    $region9: #{tpu_custom_call.1} parent=1 // pred_fallthru
      _
    // Predicated region
    $region10: #{tpu_custom_call.1} parent=1 // pred_check
      _
    $region11: #{tpu_custom_call.1} parent=1 // pred_check_branch
      %44 = sbr.rel (0) target = $region13
    $region12: #{tpu_custom_call.1} parent=1 // pred_region
      _
    $region13: #{tpu_custom_call.1} parent=1 // pred_fallthru
      _
    // Predicated region
    $region14: #{tpu_custom_call.1} parent=1 // pred_check
      _
    $region15: #{tpu_custom_call.1} parent=1 // pred_check_branch
      %46 = sbr.rel (0) target = $region17
    $region16: #{tpu_custom_call.1} parent=1 // pred_region
      %s48 = ssub.s32 16, 16
      %49 = vsyncadd [#allocation7], %s48
      %s51 = sshll.u32 [#allocation6], 4
      %s52 = int_to_ptr.vmem [resolvable:$true] %s51
      %54 = dma.hbm_to_vmem [thread:$0]  %s3, 16, %s52, [#allocation7]
    $region17: #{tpu_custom_call.1} parent=1 // pred_fallthru
      _
    // Predicated region
    $region18: #{tpu_custom_call.1} parent=1 // pred_check
      _
    $region19: #{tpu_custom_call.1} parent=1 // pred_check_branch
      %56 = sbr.rel (0) target = $region21
    $region20: #{tpu_custom_call.1} parent=1 // pred_region
      %s58 = ssub.s32 16, 16
      %59 = vsyncadd [#allocation7], %s58
      %s61 = sshll.u32 [#allocation8], 4
      %s62 = int_to_ptr.vmem [resolvable:$true] %s61
      %64 = dma.hbm_to_vmem [thread:$0]  %s4, 16, %s62, [#allocation7]
    $region21: #{tpu_custom_call.1} parent=1 // pred_fallthru
      _
    // Predicated region
    $region22: #{tpu_custom_call.1} parent=1 // pred_check
      _
    $region23: #{tpu_custom_call.1} parent=1 // pred_check_branch
      %66 = sbr.rel (0) target = $region25
    $region24: #{tpu_custom_call.1} parent=1 // pred_region
      _
    $region25: #{tpu_custom_call.1} parent=1 // pred_fallthru
      _
    // Predicated region
    $region26: #{tpu_custom_call.1} parent=1 // pred_check
      _
    $region27: #{tpu_custom_call.1} parent=1 // pred_check_branch
      %68 = sbr.rel (0) target = $region29
    $region28: #{tpu_custom_call.1} parent=1 // pred_region
      %s70 = ssub.s32 16, 16
      %71 = vsyncadd [#allocation10], %s70
      %s73 = sshll.u32 [#allocation9], 4
      %s74 = int_to_ptr.vmem [resolvable:$true] %s73
      %76 = dma.hbm_to_vmem [thread:$0]  %s6, 16, %s74, [#allocation10]
    $region29: #{tpu_custom_call.1} parent=1 // pred_fallthru
      _
    // Predicated region
    $region30: #{tpu_custom_call.1} parent=1 // pred_check
      _
    $region31: #{tpu_custom_call.1} parent=1 // pred_check_branch
      %78 = sbr.rel (0) target = $region33
    $region32: #{tpu_custom_call.1} parent=1 // pred_region
      %s80 = ssub.s32 16, 16
      %81 = vsyncadd [#allocation10], %s80
      %s83 = sshll.u32 [#allocation11], 4
      %s84 = int_to_ptr.vmem [resolvable:$true] %s83
      %86 = dma.hbm_to_vmem [thread:$0]  %s7, 16, %s84, [#allocation10]
    $region33: #{tpu_custom_call.1} parent=1 // pred_fallthru
      _
    // Predicated region
    $region34: #{tpu_custom_call.1} parent=1 // pred_check
      _
    $region35: #{tpu_custom_call.1} parent=1 // pred_check_branch
      %88 = sbr.rel (0) target = $region37
    $region36: #{tpu_custom_call.1} parent=1 // pred_region
      _
    $region37: #{tpu_custom_call.1} parent=1 // pred_fallthru
      _
    // Predicated region
    $region38: #{tpu_custom_call.1} parent=1 // pred_check
      _
    $region39: #{tpu_custom_call.1} parent=1 // pred_check_branch
      %90 = sbr.rel (0) target = $region41
    $region40: #{tpu_custom_call.1} parent=1 // pred_region
      %s92 = ssub.s32 16, 16
      %93 = vsyncadd [#allocation13], %s92
      %s95 = sshll.u32 [#allocation12], 4
      %s96 = int_to_ptr.vmem [resolvable:$true] %s95
      %98 = dma.hbm_to_vmem [thread:$0]  %s9, 16, %s96, [#allocation13]
    $region41: #{tpu_custom_call.1} parent=1 // pred_fallthru
      _
    // Predicated region
    $region42: #{tpu_custom_call.1} parent=1 // pred_check
      _
    $region43: #{tpu_custom_call.1} parent=1 // pred_check_branch
      %100 = sbr.rel (0) target = $region45
    $region44: #{tpu_custom_call.1} parent=1 // pred_region
      _
    $region45: #{tpu_custom_call.1} parent=1 // pred_fallthru
      _
    // Predicated region
    $region46: #{tpu_custom_call.1} parent=1 // pred_check
      _
    $region47: #{tpu_custom_call.1} parent=1 // pred_check_branch
      %102 = sbr.rel (0) target = $region49
    $region48: #{tpu_custom_call.1} parent=1 // pred_region
      %s104 = ssub.s32 128, 128
      %105 = vsyncadd [#allocation13], %s104
      %s107 = sshll.u32 [#allocation14], 4
      %s108 = int_to_ptr.vmem [resolvable:$true] %s107
      %110 = dma.hbm_to_vmem [thread:$0]  %s11, 128, %s108, [#allocation13]
    $region49: #{tpu_custom_call.1} parent=1 // pred_fallthru
      _
    // Predicated region
    $region50: #{tpu_custom_call.1} parent=1 // pred_check
      _
    $region51: #{tpu_custom_call.1} parent=1 // pred_check_branch
      %112 = sbr.rel (0) target = $region53
    $region52: #{tpu_custom_call.1} parent=1 // pred_region
      _
    $region53: #{tpu_custom_call.1} parent=1 // pred_fallthru
      _
    // Predicated region
    $region54: #{tpu_custom_call.1} parent=1 // pred_check
      _
    $region55: #{tpu_custom_call.1} parent=1 // pred_check_branch
      %114 = sbr.rel (0) target = $region57
    $region56: #{tpu_custom_call.1} parent=1 // pred_region
      _
    $region57: #{tpu_custom_call.1} parent=1 // pred_fallthru
      _
    // Predicated region
    $region58: #{tpu_custom_call.1} parent=1 // pred_check
      _
    $region59: #{tpu_custom_call.1} parent=1 // pred_check_branch
      %116 = sbr.rel (0) target = $region61
    $region60: #{tpu_custom_call.1} parent=1 // pred_region
      _
    $region61: #{tpu_custom_call.1} parent=1 // pred_fallthru
      _
    // Predicated region
    $region62: #{tpu_custom_call.1} parent=1 // pred_check
      _
    $region63: #{tpu_custom_call.1} parent=1 // pred_check_branch
      %118 = sbr.rel (0) target = $region65
    $region64: #{tpu_custom_call.1} parent=1 // pred_region
      _
    $region65: #{tpu_custom_call.1} parent=1 // pred_fallthru
      _
    // Predicated region
    $region66: #{tpu_custom_call.1} parent=1 // pred_check
      _
    $region67: #{tpu_custom_call.1} parent=1 // pred_check_branch
      %120 = sbr.rel (0) target = $region69
    $region68: #{tpu_custom_call.1} parent=1 // pred_region
      _
    $region69: #{tpu_custom_call.1} parent=1 // pred_fallthru
      _
    // Predicated region
    $region70: #{tpu_custom_call.1} parent=1 // pred_check
      _
    $region71: #{tpu_custom_call.1} parent=1 // pred_check_branch
      %122 = sbr.rel (0) target = $region73
    $region72: #{tpu_custom_call.1} parent=1 // pred_region
      _
    $region73: #{tpu_custom_call.1} parent=1 // pred_fallthru
      _
    // Predicated region
    $region74: #{tpu_custom_call.1} parent=1 // pred_check
      _
    $region75: #{tpu_custom_call.1} parent=1 // pred_check_branch
      %124 = sbr.rel (0) target = $region77
    $region76: #{tpu_custom_call.1} parent=1 // pred_region
      _
    $region77: #{tpu_custom_call.1} parent=1 // pred_fallthru
      _
    // Predicated region
    $region78: #{tpu_custom_call.1} parent=1 // pred_check
      _
    $region79: #{tpu_custom_call.1} parent=1 // pred_check_branch
      %126 = sbr.rel (0) target = $region81
    $region80: #{tpu_custom_call.1} parent=1 // pred_region
      _
    $region81: #{tpu_custom_call.1} parent=1 // pred_fallthru
      _
    // Predicated region
    $region82: #{tpu_custom_call.1} parent=1 // pred_check
      _
    $region83: #{tpu_custom_call.1} parent=1 // pred_check_branch
      %128 = sbr.rel (0) target = $region85
    $region84: #{tpu_custom_call.1} parent=1 // pred_region
      %129 = dma.done [#allocation4], 32
    $region85: #{tpu_custom_call.1} parent=1 // pred_fallthru
      _
    // Predicated region
    $region86: #{tpu_custom_call.1} parent=1 // pred_check
      _
    $region87: #{tpu_custom_call.1} parent=1 // pred_check_branch
      %131 = sbr.rel (0) target = $region89
    $region88: #{tpu_custom_call.1} parent=1 // pred_region
      %132 = dma.done [#allocation7], 16
    $region89: #{tpu_custom_call.1} parent=1 // pred_fallthru
      _
    // Predicated region
    $region90: #{tpu_custom_call.1} parent=1 // pred_check
      _
    $region91: #{tpu_custom_call.1} parent=1 // pred_check_branch
      %134 = sbr.rel (0) target = $region93
    $region92: #{tpu_custom_call.1} parent=1 // pred_region
      %135 = dma.done [#allocation7], 16
    $region93: #{tpu_custom_call.1} parent=1 // pred_fallthru
      _
    // Predicated region
    $region94: #{tpu_custom_call.1} parent=1 // pred_check
      _
    $region95: #{tpu_custom_call.1} parent=1 // pred_check_branch
      %137 = sbr.rel (0) target = $region97
    $region96: #{tpu_custom_call.1} parent=1 // pred_region
      %138 = dma.done [#allocation10], 16
    $region97: #{tpu_custom_call.1} parent=1 // pred_fallthru
      _
    // Predicated region
    $region98: #{tpu_custom_call.1} parent=1 // pred_check
      _
    $region99: #{tpu_custom_call.1} parent=1 // pred_check_branch
      %140 = sbr.rel (0) target = $region101
    $region100: #{tpu_custom_call.1} parent=1 // pred_region
      %141 = dma.done [#allocation10], 16
    $region101: #{tpu_custom_call.1} parent=1 // pred_fallthru
      _
    // Predicated region
    $region102: #{tpu_custom_call.1} parent=1 // pred_check
      _
    $region103: #{tpu_custom_call.1} parent=1 // pred_check_branch
      %143 = sbr.rel (0) target = $region105
    $region104: #{tpu_custom_call.1} parent=1 // pred_region
      %144 = dma.done [#allocation13], 16
    $region105: #{tpu_custom_call.1} parent=1 // pred_fallthru
      _
    // Predicated region
    $region106: #{tpu_custom_call.1} parent=1 // pred_check
      _
    $region107: #{tpu_custom_call.1} parent=1 // pred_check_branch
      %146 = sbr.rel (0) target = $region109
    $region108: #{tpu_custom_call.1} parent=1 // pred_region
      %147 = dma.done [#allocation13], 128
    $region109: #{tpu_custom_call.1} parent=1 // pred_fallthru
      _
    %s148 = sld [smem:[#allocation2]]
    %v149 = vld [vmem:[#allocation3] sm:$0x3]
    %v150 = vld [vmem:[%s2] sm:$0xff]
    %v151 = vld [vmem:[%s2 + $0x8] sm:$0xff]
    %v152 = vld [vmem:[#allocation6] sm:$0x1]
    %v153 = vld [vmem:[#allocation8] sm:$0x1]
    %v154 = vstv %s148
    %v155 = vmul.f32 %v154, %v152
    %v156 = vadd.f32 %v155, %v153
    %v158 = vlaneseq
    %v159 = vshrl.u32 %v158, 7
    %v160 = vsub.s32 0, %v159
    %v161 = vrot.slane %v156, %v160
    %vm163 = vcmask 130048
    %v165 = vsel %vm163, %v149, 0
    %167 = vmatprep.subr.mxu0 0.0
    %168 = vmatpush1.msra.mxu0 0.0
    %169 = vmatprep.subr.mxu0 0.0
    %170 = vmatpush1.msra.mxu0 0.0
    %171 = vmatprep.subr.mxu0 0.0
    %172 = vmatpush1.msra.mxu0 0.0
    %173 = vmatprep.subr.mxu0 0.0
    %174 = vmatpush1.msra.mxu0 0.0
    %175 = vmatprep.subr.mxu0 0.0
    %176 = vmatpush1.msra.mxu0 0.0
    %177 = vmatprep.subr.mxu0 0.0
    %178 = vmatpush1.msra.mxu0 0.0
    %179 = vmatprep.subr.mxu0 0.0
    %180 = vmatpush1.msra.mxu0 0.0
    %181 = vmatprep.subr.mxu0 0.0
    %182 = vmatpush1.msra.mxu0 0.0
    %183 = vmatprep.subr.mxu0 0.0
    %184 = vmatpush1.msra.mxu0 0.0
    %185 = vmatprep.subr.mxu0 0.0
    %186 = vmatpush1.msra.mxu0 0.0
    %187 = vmatprep.subr.mxu0 0.0
    %188 = vmatpush1.msra.mxu0 0.0
    %189 = vmatprep.subr.mxu0 0.0
    %190 = vmatpush1.msra.mxu0 0.0
    %191 = vmatprep.subr.mxu0 0.0
    %192 = vmatpush1.msra.mxu0 0.0
    %193 = vmatprep.subr.mxu0 0.0
    %194 = vmatpush1.msra.mxu0 0.0
    %195 = vmatprep.subr.mxu0 0.0
    %196 = vmatpush1.msra.mxu0 %v151
    %197 = vmatprep.subr.mxu0 0.0
    %198 = vmatpush1.msra.mxu0 %v150
    %199 = vmatprep.subr.mxu0 0.0
    %200 = vmatpush2.msra.mxu0 0.0
    %201 = vmatprep.subr.mxu0 0.0
    %202 = vmatpush2.msra.mxu0 0.0
    %203 = vmatprep.subr.mxu0 0.0
    %204 = vmatpush2.msra.mxu0 0.0
    %205 = vmatprep.subr.mxu0 0.0
    %206 = vmatpush2.msra.mxu0 0.0
    %207 = vmatprep.subr.mxu0 0.0
    %208 = vmatpush2.msra.mxu0 0.0
    %209 = vmatprep.subr.mxu0 0.0
    %210 = vmatpush2.msra.mxu0 0.0
    %211 = vmatprep.subr.mxu0 0.0
    %212 = vmatpush2.msra.mxu0 0.0
    %213 = vmatprep.subr.mxu0 0.0
    %214 = vmatpush2.msra.mxu0 0.0
    %215 = vmatprep.subr.mxu0 0.0
    %216 = vmatpush2.msra.mxu0 0.0
    %217 = vmatprep.subr.mxu0 0.0
    %218 = vmatpush2.msra.mxu0 0.0
    %219 = vmatprep.subr.mxu0 0.0
    %220 = vmatpush2.msra.mxu0 0.0
    %221 = vmatprep.subr.mxu0 0.0
    %222 = vmatpush2.msra.mxu0 0.0
    %223 = vmatprep.subr.mxu0 0.0
    %224 = vmatpush2.msra.mxu0 0.0
    %225 = vmatprep.subr.mxu0 0.0
    %226 = vmatpush2.msra.mxu0 0.0
    %227 = vmatprep.subr.mxu0 0.0
    %228 = vmatpush2.msra.mxu0 0.0
    %229 = vmatprep.subr.mxu0 0.0
    %230 = vmatpush2.msra.mxu0 0.0
    %231 = vmatprep.mubr.f32.mxu0 0.0
    %232 = vmatmul.mubr.f32.gmra.mxu0 %v165
    %v233 = vpop.f32.mrf.mxu0
    %v234 = vadd.f32 %v161, %v233
    %v235 = vpop.f32.mrf.mxu0
    %236 = vdwg.mxu0
    %v237 = vmax.f32 %v234, 0.0
    %v238 = vand.u32 2147483647, %v234
    %v239 = vsub.f32 0.0, %v238
    %v240 = vmul.f32 %v239, 1.442695
    %v241 = vpow.pop %v240
    %v242 = vadd.f32 %v241, 1.0
    %v243 = vlog2.pop %v242
    %v244 = vmul.f32 %v243, 0.6931472
    %v245 = vmul.f32 -0.5, %v241
    %v246 = vadd.f32 %v245, 1.0
    %v247 = vmul.f32 %v246, %v241
    %v248 = vand.u32 2147483647, %v241
    %vm249 = vcmp.lt.f32.partialorder %v248, 0.0004427343
    %v250 = vsel %vm249, %v247, %v244
    %v251 = vadd.f32 %v237, %v250
    %v252 = vld [vmem:[%s5] sm:$0xff]
    %v253 = vld [vmem:[%s5 + $0x8] sm:$0xff]
    %v254 = vld [vmem:[%s5 + $0x10] sm:$0xff]
    %v255 = vld [vmem:[%s5 + $0x18] sm:$0xff]
    %v256 = vld [vmem:[#allocation9] sm:$0x1]
    %v257 = vld [vmem:[#allocation11] sm:$0x1]
    %v258 = vmul.f32 %v154, %v256
    %v259 = vadd.f32 %v258, %v257
    %v261 = vlaneseq
    %v262 = vshrl.u32 %v261, 7
    %v263 = vsub.s32 0, %v262
    %v264 = vrot.slane %v259, %v263
    %vm266 = vcmask 261120
    %v268 = vsel %vm266, %v251, 0
    %270 = vmatprep.subr.mxu0 0.0
    %271 = vmatpush1.msra.mxu0 0.0
    %272 = vmatprep.subr.mxu0 0.0
    %273 = vmatpush1.msra.mxu0 0.0
    %274 = vmatprep.subr.mxu0 0.0
    %275 = vmatpush1.msra.mxu0 0.0
    %276 = vmatprep.subr.mxu0 0.0
    %277 = vmatpush1.msra.mxu0 0.0
    %278 = vmatprep.subr.mxu0 0.0
    %279 = vmatpush1.msra.mxu0 0.0
    %280 = vmatprep.subr.mxu0 0.0
    %281 = vmatpush1.msra.mxu0 0.0
    %282 = vmatprep.subr.mxu0 0.0
    %283 = vmatpush1.msra.mxu0 0.0
    %284 = vmatprep.subr.mxu0 0.0
    %285 = vmatpush1.msra.mxu0 0.0
    %286 = vmatprep.subr.mxu0 0.0
    %287 = vmatpush1.msra.mxu0 0.0
    %288 = vmatprep.subr.mxu0 0.0
    %289 = vmatpush1.msra.mxu0 0.0
    %290 = vmatprep.subr.mxu0 0.0
    %291 = vmatpush1.msra.mxu0 0.0
    %292 = vmatprep.subr.mxu0 0.0
    %293 = vmatpush1.msra.mxu0 0.0
    %294 = vmatprep.subr.mxu0 0.0
    %295 = vmatpush1.msra.mxu0 %v255
    %296 = vmatprep.subr.mxu0 0.0
    %297 = vmatpush1.msra.mxu0 %v254
    %298 = vmatprep.subr.mxu0 0.0
    %299 = vmatpush1.msra.mxu0 %v253
    %300 = vmatprep.subr.mxu0 0.0
    %301 = vmatpush1.msra.mxu0 %v252
    %302 = vmatprep.subr.mxu0 0.0
    %303 = vmatpush2.msra.mxu0 0.0
    %304 = vmatprep.subr.mxu0 0.0
    %305 = vmatpush2.msra.mxu0 0.0
    %306 = vmatprep.subr.mxu0 0.0
    %307 = vmatpush2.msra.mxu0 0.0
    %308 = vmatprep.subr.mxu0 0.0
    %309 = vmatpush2.msra.mxu0 0.0
    %310 = vmatprep.subr.mxu0 0.0
    %311 = vmatpush2.msra.mxu0 0.0
    %312 = vmatprep.subr.mxu0 0.0
    %313 = vmatpush2.msra.mxu0 0.0
    %314 = vmatprep.subr.mxu0 0.0
    %315 = vmatpush2.msra.mxu0 0.0
    %316 = vmatprep.subr.mxu0 0.0
    %317 = vmatpush2.msra.mxu0 0.0
    %318 = vmatprep.subr.mxu0 0.0
    %319 = vmatpush2.msra.mxu0 0.0
    %320 = vmatprep.subr.mxu0 0.0
    %321 = vmatpush2.msra.mxu0 0.0
    %322 = vmatprep.subr.mxu0 0.0
    %323 = vmatpush2.msra.mxu0 0.0
    %324 = vmatprep.subr.mxu0 0.0
    %325 = vmatpush2.msra.mxu0 0.0
    %326 = vmatprep.subr.mxu0 0.0
    %327 = vmatpush2.msra.mxu0 0.0
    %328 = vmatprep.subr.mxu0 0.0
    %329 = vmatpush2.msra.mxu0 0.0
    %330 = vmatprep.subr.mxu0 0.0
    %331 = vmatpush2.msra.mxu0 0.0
    %332 = vmatprep.subr.mxu0 0.0
    %333 = vmatpush2.msra.mxu0 0.0
    %334 = vmatprep.mubr.f32.mxu0 0.0
    %335 = vmatmul.mubr.f32.gmra.mxu0 %v268
    %v336 = vpop.f32.mrf.mxu0
    %v337 = vadd.f32 %v264, %v336
    %v338 = vpop.f32.mrf.mxu0
    %339 = vdwg.mxu0
    %v340 = vmax.f32 %v337, 0.0
    %v341 = vand.u32 2147483647, %v337
    %v342 = vsub.f32 0.0, %v341
    %v343 = vmul.f32 %v342, 1.442695
    %v344 = vpow.pop %v343
    %v345 = vadd.f32 %v344, 1.0
    %v346 = vlog2.pop %v345
    %v347 = vmul.f32 %v346, 0.6931472
    %v348 = vmul.f32 -0.5, %v344
    %v349 = vadd.f32 %v348, 1.0
    %v350 = vmul.f32 %v349, %v344
    %v351 = vand.u32 2147483647, %v344
    %vm352 = vcmp.lt.f32.partialorder %v351, 0.0004427343
    %v353 = vsel %vm352, %v350, %v347
    %v354 = vadd.f32 %v340, %v353
    %v355 = vld [vmem:[%s8] sm:$0xff]
    %v356 = vld [vmem:[%s8 + $0x8] sm:$0xff]
    %v357 = vld [vmem:[%s8 + $0x10] sm:$0xff]
    %v358 = vld [vmem:[%s8 + $0x18] sm:$0xff]
    %v359 = vld [vmem:[#allocation12] sm:$0x1]
    %v360 = vld [vmem:[%s10] sm:$0x1]
    %v361 = vmul.f32 %v154, %v359
    %v362 = vadd.f32 %v361, %v360
    %v364 = vlaneseq
    %v365 = vshrl.u32 %v364, 7
    %v366 = vsub.s32 0, %v365
    %v367 = vrot.slane %v362, %v366
    %v370 = vsel %vm266, %v354, 0
    %372 = vmatprep.subr.mxu0 0.0
    %373 = vmatpush1.msra.mxu0 0.0
    %374 = vmatprep.subr.mxu0 0.0
    %375 = vmatpush1.msra.mxu0 0.0
    %376 = vmatprep.subr.mxu0 0.0
    %377 = vmatpush1.msra.mxu0 0.0
    %378 = vmatprep.subr.mxu0 0.0
    %379 = vmatpush1.msra.mxu0 0.0
    %380 = vmatprep.subr.mxu0 0.0
    %381 = vmatpush1.msra.mxu0 0.0
    %382 = vmatprep.subr.mxu0 0.0
    %383 = vmatpush1.msra.mxu0 0.0
    %384 = vmatprep.subr.mxu0 0.0
    %385 = vmatpush1.msra.mxu0 0.0
    %386 = vmatprep.subr.mxu0 0.0
    %387 = vmatpush1.msra.mxu0 0.0
    %388 = vmatprep.subr.mxu0 0.0
    %389 = vmatpush1.msra.mxu0 0.0
    %390 = vmatprep.subr.mxu0 0.0
    %391 = vmatpush1.msra.mxu0 0.0
    %392 = vmatprep.subr.mxu0 0.0
    %393 = vmatpush1.msra.mxu0 0.0
    %394 = vmatprep.subr.mxu0 0.0
    %395 = vmatpush1.msra.mxu0 0.0
    %396 = vmatprep.subr.mxu0 0.0
    %397 = vmatpush1.msra.mxu0 %v358
    %398 = vmatprep.subr.mxu0 0.0
    %399 = vmatpush1.msra.mxu0 %v357
    %400 = vmatprep.subr.mxu0 0.0
    %401 = vmatpush1.msra.mxu0 %v356
    %402 = vmatprep.subr.mxu0 0.0
    %403 = vmatpush1.msra.mxu0 %v355
    %404 = vmatprep.subr.mxu0 0.0
    %405 = vmatpush2.msra.mxu0 0.0
    %406 = vmatprep.subr.mxu0 0.0
    %407 = vmatpush2.msra.mxu0 0.0
    %408 = vmatprep.subr.mxu0 0.0
    %409 = vmatpush2.msra.mxu0 0.0
    %410 = vmatprep.subr.mxu0 0.0
    %411 = vmatpush2.msra.mxu0 0.0
    %412 = vmatprep.subr.mxu0 0.0
    %413 = vmatpush2.msra.mxu0 0.0
    %414 = vmatprep.subr.mxu0 0.0
    %415 = vmatpush2.msra.mxu0 0.0
    %416 = vmatprep.subr.mxu0 0.0
    %417 = vmatpush2.msra.mxu0 0.0
    %418 = vmatprep.subr.mxu0 0.0
    %419 = vmatpush2.msra.mxu0 0.0
    %420 = vmatprep.subr.mxu0 0.0
    %421 = vmatpush2.msra.mxu0 0.0
    %422 = vmatprep.subr.mxu0 0.0
    %423 = vmatpush2.msra.mxu0 0.0
    %424 = vmatprep.subr.mxu0 0.0
    %425 = vmatpush2.msra.mxu0 0.0
    %426 = vmatprep.subr.mxu0 0.0
    %427 = vmatpush2.msra.mxu0 0.0
    %428 = vmatprep.subr.mxu0 0.0
    %429 = vmatpush2.msra.mxu0 0.0
    %430 = vmatprep.subr.mxu0 0.0
    %431 = vmatpush2.msra.mxu0 0.0
    %432 = vmatprep.subr.mxu0 0.0
    %433 = vmatpush2.msra.mxu0 0.0
    %434 = vmatprep.subr.mxu0 0.0
    %435 = vmatpush2.msra.mxu0 0.0
    %436 = vmatprep.mubr.f32.mxu0 0.0
    %437 = vmatmul.mubr.f32.gmra.mxu0 %v370
    %v438 = vpop.f32.mrf.mxu0
    %v439 = vadd.f32 %v367, %v438
    %v440 = vpop.f32.mrf.mxu0
    %441 = vdwg.mxu0
    %v442 = vld [vmem:[#allocation14] sm:$0xff]
    %v443 = vld [vmem:[%s12] sm:$0x1]
    %v444 = vld [vmem:[%s13] sm:$0x1]
    %v445 = vmul.f32 %v154, %v443
    %v446 = vadd.f32 %v445, %v444
    %v448 = vlaneseq
    %v449 = vshrl.u32 %v448, 7
    %v450 = vsub.s32 0, %v449
    %v451 = vrot.slane %v446, %v450
    %453 = vrot.lane.b32.xlu0 %v149, 120
    %v454 = vpop.permute.xlu0 %453
    %vm455 = vcmask 64512
    %v456 = vsel %vm455, %v454, 0
    %458 = vmatprep.subr.mxu0 0.0
    %459 = vmatpush1.msra.mxu0 0.0
    %460 = vmatprep.subr.mxu0 0.0
    %461 = vmatpush1.msra.mxu0 0.0
    %462 = vmatprep.subr.mxu0 0.0
    %463 = vmatpush1.msra.mxu0 0.0
    %464 = vmatprep.subr.mxu0 0.0
    %465 = vmatpush1.msra.mxu0 0.0
    %466 = vmatprep.subr.mxu0 0.0
    %467 = vmatpush1.msra.mxu0 0.0
    %468 = vmatprep.subr.mxu0 0.0
    %469 = vmatpush1.msra.mxu0 0.0
    %470 = vmatprep.subr.mxu0 0.0
    %471 = vmatpush1.msra.mxu0 0.0
    %472 = vmatprep.subr.mxu0 0.0
    %473 = vmatpush1.msra.mxu0 0.0
    %474 = vmatprep.subr.mxu0 0.0
    %475 = vmatpush1.msra.mxu0 0.0
    %476 = vmatprep.subr.mxu0 0.0
    %477 = vmatpush1.msra.mxu0 0.0
    %478 = vmatprep.subr.mxu0 0.0
    %479 = vmatpush1.msra.mxu0 0.0
    %480 = vmatprep.subr.mxu0 0.0
    %481 = vmatpush1.msra.mxu0 0.0
    %482 = vmatprep.subr.mxu0 0.0
    %483 = vmatpush1.msra.mxu0 0.0
    %484 = vmatprep.subr.mxu0 0.0
    %485 = vmatpush1.msra.mxu0 0.0
    %486 = vmatprep.subr.mxu0 0.0
    %487 = vmatpush1.msra.mxu0 0.0
    %488 = vmatprep.subr.mxu0 0.0
    %489 = vmatpush1.msra.mxu0 %v442
    %490 = vmatprep.subr.mxu0 0.0
    %491 = vmatpush2.msra.mxu0 0.0
    %492 = vmatprep.subr.mxu0 0.0
    %493 = vmatpush2.msra.mxu0 0.0
    %494 = vmatprep.subr.mxu0 0.0
    %495 = vmatpush2.msra.mxu0 0.0
    %496 = vmatprep.subr.mxu0 0.0
    %497 = vmatpush2.msra.mxu0 0.0
    %498 = vmatprep.subr.mxu0 0.0
    %499 = vmatpush2.msra.mxu0 0.0
    %500 = vmatprep.subr.mxu0 0.0
    %501 = vmatpush2.msra.mxu0 0.0
    %502 = vmatprep.subr.mxu0 0.0
    %503 = vmatpush2.msra.mxu0 0.0
    %504 = vmatprep.subr.mxu0 0.0
    %505 = vmatpush2.msra.mxu0 0.0
    %506 = vmatprep.subr.mxu0 0.0
    %507 = vmatpush2.msra.mxu0 0.0
    %508 = vmatprep.subr.mxu0 0.0
    %509 = vmatpush2.msra.mxu0 0.0
    %510 = vmatprep.subr.mxu0 0.0
    %511 = vmatpush2.msra.mxu0 0.0
    %512 = vmatprep.subr.mxu0 0.0
    %513 = vmatpush2.msra.mxu0 0.0
    %514 = vmatprep.subr.mxu0 0.0
    %515 = vmatpush2.msra.mxu0 0.0
    %516 = vmatprep.subr.mxu0 0.0
    %517 = vmatpush2.msra.mxu0 0.0
    %518 = vmatprep.subr.mxu0 0.0
    %519 = vmatpush2.msra.mxu0 0.0
    %520 = vmatprep.subr.mxu0 0.0
    %521 = vmatpush2.msra.mxu0 0.0
    %522 = vmatprep.mubr.f32.mxu0 0.0
    %523 = vmatmul.mubr.f32.gmra.mxu0 %v456
    %v524 = vpop.f32.mrf.mxu0
    %v525 = vadd.f32 %v451, %v524
    %v526 = vpop.f32.mrf.mxu0
    %527 = vdwg.mxu0
    %v528 = vmax.f32 %v525, 0.0
    %v529 = vand.u32 2147483647, %v525
    %v530 = vsub.f32 0.0, %v529
    %v531 = vmul.f32 %v530, 1.442695
    %v532 = vpow.pop %v531
    %v533 = vadd.f32 %v532, 1.0
    %v534 = vlog2.pop %v533
    %v535 = vmul.f32 %v534, 0.6931472
    %v536 = vmul.f32 -0.5, %v532
    %v537 = vadd.f32 %v536, 1.0
    %v538 = vmul.f32 %v537, %v532
    %v539 = vand.u32 2147483647, %v532
    %vm540 = vcmp.lt.f32.partialorder %v539, 0.0004427343
    %v541 = vsel %vm540, %v538, %v535
    %v542 = vadd.f32 %v528, %v541
    %v543 = vld [vmem:[%s14] sm:$0xff]
    %v544 = vld [vmem:[%s14 + $0x8] sm:$0xff]
    %v545 = vld [vmem:[%s14 + $0x10] sm:$0xff]
    %v546 = vld [vmem:[%s14 + $0x18] sm:$0xff]
    %v547 = vld [vmem:[%s15] sm:$0x1]
    %v548 = vld [vmem:[%s16] sm:$0x1]
    %v549 = vmul.f32 %v154, %v547
    %v550 = vadd.f32 %v549, %v548
    %v552 = vlaneseq
    %v553 = vshrl.u32 %v552, 7
    %v554 = vsub.s32 0, %v553
    %v555 = vrot.slane %v550, %v554
    %v558 = vsel %vm266, %v542, 0
    %560 = vmatprep.subr.mxu0 0.0
    %561 = vmatpush1.msra.mxu0 0.0
    %562 = vmatprep.subr.mxu0 0.0
    %563 = vmatpush1.msra.mxu0 0.0
    %564 = vmatprep.subr.mxu0 0.0
    %565 = vmatpush1.msra.mxu0 0.0
    %566 = vmatprep.subr.mxu0 0.0
    %567 = vmatpush1.msra.mxu0 0.0
    %568 = vmatprep.subr.mxu0 0.0
    %569 = vmatpush1.msra.mxu0 0.0
    %570 = vmatprep.subr.mxu0 0.0
    %571 = vmatpush1.msra.mxu0 0.0
    %572 = vmatprep.subr.mxu0 0.0
    %573 = vmatpush1.msra.mxu0 0.0
    %574 = vmatprep.subr.mxu0 0.0
    %575 = vmatpush1.msra.mxu0 0.0
    %576 = vmatprep.subr.mxu0 0.0
    %577 = vmatpush1.msra.mxu0 0.0
    %578 = vmatprep.subr.mxu0 0.0
    %579 = vmatpush1.msra.mxu0 0.0
    %580 = vmatprep.subr.mxu0 0.0
    %581 = vmatpush1.msra.mxu0 0.0
    %582 = vmatprep.subr.mxu0 0.0
    %583 = vmatpush1.msra.mxu0 0.0
    %584 = vmatprep.subr.mxu0 0.0
    %585 = vmatpush1.msra.mxu0 %v546
    %586 = vmatprep.subr.mxu0 0.0
    %587 = vmatpush1.msra.mxu0 %v545
    %588 = vmatprep.subr.mxu0 0.0
    %589 = vmatpush1.msra.mxu0 %v544
    %590 = vmatprep.subr.mxu0 0.0
    %591 = vmatpush1.msra.mxu0 %v543
    %592 = vmatprep.subr.mxu0 0.0
    %593 = vmatpush2.msra.mxu0 0.0
    %594 = vmatprep.subr.mxu0 0.0
    %595 = vmatpush2.msra.mxu0 0.0
    %596 = vmatprep.subr.mxu0 0.0
    %597 = vmatpush2.msra.mxu0 0.0
    %598 = vmatprep.subr.mxu0 0.0
    %599 = vmatpush2.msra.mxu0 0.0
    %600 = vmatprep.subr.mxu0 0.0
    %601 = vmatpush2.msra.mxu0 0.0
    %602 = vmatprep.subr.mxu0 0.0
    %603 = vmatpush2.msra.mxu0 0.0
    %604 = vmatprep.subr.mxu0 0.0
    %605 = vmatpush2.msra.mxu0 0.0
    %606 = vmatprep.subr.mxu0 0.0
    %607 = vmatpush2.msra.mxu0 0.0
    %608 = vmatprep.subr.mxu0 0.0
    %609 = vmatpush2.msra.mxu0 0.0
    %610 = vmatprep.subr.mxu0 0.0
    %611 = vmatpush2.msra.mxu0 0.0
    %612 = vmatprep.subr.mxu0 0.0
    %613 = vmatpush2.msra.mxu0 0.0
    %614 = vmatprep.subr.mxu0 0.0
    %615 = vmatpush2.msra.mxu0 0.0
    %616 = vmatprep.subr.mxu0 0.0
    %617 = vmatpush2.msra.mxu0 0.0
    %618 = vmatprep.subr.mxu0 0.0
    %619 = vmatpush2.msra.mxu0 0.0
    %620 = vmatprep.subr.mxu0 0.0
    %621 = vmatpush2.msra.mxu0 0.0
    %622 = vmatprep.subr.mxu0 0.0
    %623 = vmatpush2.msra.mxu0 0.0
    %624 = vmatprep.mubr.f32.mxu0 0.0
    %625 = vmatmul.mubr.f32.gmra.mxu0 %v558
    %v626 = vpop.f32.mrf.mxu0
    %v627 = vadd.f32 %v555, %v626
    %v628 = vpop.f32.mrf.mxu0
    %629 = vdwg.mxu0
    %v630 = vmax.f32 %v627, 0.0
    %v631 = vand.u32 2147483647, %v627
    %v632 = vsub.f32 0.0, %v631
    %v633 = vmul.f32 %v632, 1.442695
    %v634 = vpow.pop %v633
    %v635 = vadd.f32 %v634, 1.0
    %v636 = vlog2.pop %v635
    %v637 = vmul.f32 %v636, 0.6931472
    %v638 = vmul.f32 -0.5, %v634
    %v639 = vadd.f32 %v638, 1.0
    %v640 = vmul.f32 %v639, %v634
    %v641 = vand.u32 2147483647, %v634
    %vm642 = vcmp.lt.f32.partialorder %v641, 0.0004427343
    %v643 = vsel %vm642, %v640, %v637
    %v644 = vadd.f32 %v630, %v643
    %v645 = vld [vmem:[%s17] sm:$0xff]
    %v646 = vld [vmem:[%s17 + $0x8] sm:$0xff]
    %v647 = vld [vmem:[%s17 + $0x10] sm:$0xff]
    %v648 = vld [vmem:[%s17 + $0x18] sm:$0xff]
    %v649 = vld [vmem:[%s18] sm:$0x1]
    %v650 = vld [vmem:[%s19] sm:$0x1]
    %v651 = vmul.f32 %v154, %v649
    %v652 = vadd.f32 %v651, %v650
    %v654 = vlaneseq
    %v655 = vshrl.u32 %v654, 7
    %v656 = vsub.s32 0, %v655
    %v657 = vrot.slane %v652, %v656
    %v660 = vsel %vm266, %v644, 0
    %662 = vmatprep.subr.mxu0 0.0
    %663 = vmatpush1.msra.mxu0 0.0
    %664 = vmatprep.subr.mxu0 0.0
    %665 = vmatpush1.msra.mxu0 0.0
    %666 = vmatprep.subr.mxu0 0.0
    %667 = vmatpush1.msra.mxu0 0.0
    %668 = vmatprep.subr.mxu0 0.0
    %669 = vmatpush1.msra.mxu0 0.0
    %670 = vmatprep.subr.mxu0 0.0
    %671 = vmatpush1.msra.mxu0 0.0
    %672 = vmatprep.subr.mxu0 0.0
    %673 = vmatpush1.msra.mxu0 0.0
    %674 = vmatprep.subr.mxu0 0.0
    %675 = vmatpush1.msra.mxu0 0.0
    %676 = vmatprep.subr.mxu0 0.0
    %677 = vmatpush1.msra.mxu0 0.0
    %678 = vmatprep.subr.mxu0 0.0
    %679 = vmatpush1.msra.mxu0 0.0
    %680 = vmatprep.subr.mxu0 0.0
    %681 = vmatpush1.msra.mxu0 0.0
    %682 = vmatprep.subr.mxu0 0.0
    %683 = vmatpush1.msra.mxu0 0.0
    %684 = vmatprep.subr.mxu0 0.0
    %685 = vmatpush1.msra.mxu0 0.0
    %686 = vmatprep.subr.mxu0 0.0
    %687 = vmatpush1.msra.mxu0 %v648
    %688 = vmatprep.subr.mxu0 0.0
    %689 = vmatpush1.msra.mxu0 %v647
    %690 = vmatprep.subr.mxu0 0.0
    %691 = vmatpush1.msra.mxu0 %v646
    %692 = vmatprep.subr.mxu0 0.0
    %693 = vmatpush1.msra.mxu0 %v645
    %694 = vmatprep.subr.mxu0 0.0
    %695 = vmatpush2.msra.mxu0 0.0
    %696 = vmatprep.subr.mxu0 0.0
    %697 = vmatpush2.msra.mxu0 0.0
    %698 = vmatprep.subr.mxu0 0.0
    %699 = vmatpush2.msra.mxu0 0.0
    %700 = vmatprep.subr.mxu0 0.0
    %701 = vmatpush2.msra.mxu0 0.0
    %702 = vmatprep.subr.mxu0 0.0
    %703 = vmatpush2.msra.mxu0 0.0
    %704 = vmatprep.subr.mxu0 0.0
    %705 = vmatpush2.msra.mxu0 0.0
    %706 = vmatprep.subr.mxu0 0.0
    %707 = vmatpush2.msra.mxu0 0.0
    %708 = vmatprep.subr.mxu0 0.0
    %709 = vmatpush2.msra.mxu0 0.0
    %710 = vmatprep.subr.mxu0 0.0
    %711 = vmatpush2.msra.mxu0 0.0
    %712 = vmatprep.subr.mxu0 0.0
    %713 = vmatpush2.msra.mxu0 0.0
    %714 = vmatprep.subr.mxu0 0.0
    %715 = vmatpush2.msra.mxu0 0.0
    %716 = vmatprep.subr.mxu0 0.0
    %717 = vmatpush2.msra.mxu0 0.0
    %718 = vmatprep.subr.mxu0 0.0
    %719 = vmatpush2.msra.mxu0 0.0
    %720 = vmatprep.subr.mxu0 0.0
    %721 = vmatpush2.msra.mxu0 0.0
    %722 = vmatprep.subr.mxu0 0.0
    %723 = vmatpush2.msra.mxu0 0.0
    %724 = vmatprep.subr.mxu0 0.0
    %725 = vmatpush2.msra.mxu0 0.0
    %726 = vmatprep.mubr.f32.mxu0 0.0
    %727 = vmatmul.mubr.f32.gmra.mxu0 %v660
    %v728 = vpop.f32.mrf.mxu0
    %v729 = vadd.f32 %v657, %v728
    %v730 = vpop.f32.mrf.mxu0
    %731 = vdwg.mxu0
    %733 = vrot.lane.b32.xlu0 %v729, 8
    %v734 = vpop.permute.xlu0 %733
    %v736 = vsel %vm455, %v439, %v734
    %vm737 = vcmask 123904
    %738 = vst.msk [vmem:[#allocation15] sm:$0x3] %vm737, %v736
    // Predicated region
    $region110: #{tpu_custom_call.1} parent=1 // pred_check
      _
    $region111: #{tpu_custom_call.1} parent=1 // pred_check_branch
      %740 = sbr.rel (0) target = $region113
    $region112: #{tpu_custom_call.1} parent=1 // pred_region
      %s742 = ssub.s32 32, 32
      %743 = vsyncadd [#allocation5], %s742
      %s745 = sshll.u32 [#allocation15], 4
      %s746 = int_to_ptr.vmem [resolvable:$true] %s745
      %748 = dma.vmem_to_hbm [thread:$0]  %s746, 32, %s20, [#allocation5]
    $region113: #{tpu_custom_call.1} parent=1 // pred_fallthru
      _
    // Predicated region
    $region114: #{tpu_custom_call.1} parent=1 // pred_check
      _
    $region115: #{tpu_custom_call.1} parent=1 // pred_check_branch
      %750 = sbr.rel (0) target = $region117
    $region116: #{tpu_custom_call.1} parent=1 // pred_region
      %751 = dma.done [#allocation5], 32
    $region117: #{tpu_custom_call.1} parent=1 // pred_fallthru
      _
    %752 = vsyncpa [#allocation4], 1
    %753 = vsyncpa [#allocation7], 1
    %754 = vsyncpa [#allocation10], 1
    %755 = vsyncpa [#allocation13], 1
    %756 = vsyncpa [#allocation5], 1

</llo_original>
